<compile_context>
chip_gen: v7x
topology: tpu7x:2x2x1
jax: 0.10.0
libtpu: 0.0.40
codegen_flags: <defaults>
</compile_context>

<pallas_src>
import jax
import jax.numpy as jnp
from jax.experimental import pallas as pl
from jax.experimental.pallas import tpu as pltpu


def _round_up(v, m):
    return ((v + m - 1) // m) * m


def _pad2d(a, rows, cols):
    return jnp.pad(a, ((0, rows - a.shape[0]), (0, cols - a.shape[1])))


def _make_swsa_kernel(f, d1, d2, d3, w_offs, b_offs):
    """Builds the fused MLP kernel with static slab offsets baked in."""
    w1, w2, w3 = w_offs
    b1, b2, b3, b4, b5 = b_offs

    def kernel(x_ref,      # [F,  TN] bf16  (batch on the 128-lane axis)
               w_ref,      # packed bf16 weight slab, VMEM resident
               b_ref,      # packed f32 bias / wp2 slab, VMEM resident
               risk_ref,   # [1,  TN] f32
               enc_ref):   # [D2, TN] bf16
        x = x_ref[...]
        w = w_ref[...]
        b = b_ref[...]

        # Static slices out of the resident slabs (tiny; offsets are 8-row aligned).
        we1 = w[w1:w1 + d1, 0:f]
        we2 = w[w2:w2 + d2, 0:d1]
        wp1 = w[w3:w3 + d3, 0:d2]
        be1 = b[b1:b1 + d1, :]
        be2 = b[b2:b2 + d2, :]
        bp1 = b[b3:b3 + d3, :]
        wp2 = b[b4:b4 + d3, :]
        bp2 = b[b5:b5 + 1, :]

        # --- Encoder (bf16 MXU operands, f32 accumulation, f32 VPU epilogues) ---
        h1 = jnp.dot(we1, x, preferred_element_type=jnp.float32)
        h1 = jnp.maximum(h1 + be1, 0.0)
        enc = jnp.dot(we2, h1.astype(jnp.bfloat16), preferred_element_type=jnp.float32)
        enc = jnp.maximum(enc + be2, 0.0)
        enc_bf = enc.astype(jnp.bfloat16)
        enc_ref[...] = enc_bf                    # bf16 writeback halves the enc store stream

        # --- Predictor ---
        p1 = jnp.dot(wp1, enc_bf, preferred_element_type=jnp.float32)
        p1 = jnp.maximum(p1 + bp1, 0.0)
        # Final layer (out_dim == 1): broadcast-mul + sublane reduce (VPU/XLU) instead of
        # a 1-wide MXU matmul with masked stores; result is a full-128-lane [1, TN] row.
        risk_ref[...] = jnp.sum(p1 * wp2, axis=0, keepdims=True) + bp2

    return kernel


def swsa_forward(x, params, *, block_n=4096, min_grid_steps=2,
                 x_is_transposed=False, transposed_outputs=False):
    """Returns (risk_pred, encoding_var) via the fused kernel.

    block_n: requested batch tile (clamped down to a multiple of 128).
    min_grid_steps: keep at least this many grid steps when the batch allows it, so the
        "parallel" batch axis can be sharded across v7x's two TensorCores (set to 1 on
        single-TC chips if the very largest tile is preferred).
    x_is_transposed: pass x as [F, N] (any dtype; cast to bf16 here) to skip the wrapper
        transpose pass. transposed_outputs: return (risk [1, N] f32, enc [D2, N] bf16)
        without transposing back (layout plumbing only; lets the consumer fuse it).
    """
    f = params["we1"].shape[0]
    d1 = params["we1"].shape[1]
    d2 = params["we2"].shape[1]
    d3 = params["wp1"].shape[1]
    assert params["wp2"].shape[1] == 1, "predict_dims[-1] is expected to be 1 (survival risk)"

    n = x.shape[1] if x_is_transposed else x.shape[0]

    # ---- tile sizing: big lane-dense tiles (128 multiples), but keep >= min_grid_steps
    #      tiles when the batch is big enough (v7x 2-TC sharding / pipelining).
    tn_req = max(128, (block_n // 128) * 128)
    n128 = _round_up(n, 128)
    tn_cap = max(128, ((n128 // max(min_grid_steps, 1)) // 128) * 128)
    tn = min(tn_req, tn_cap)
    padded_n = pl.cdiv(n, tn) * tn
    grid = (padded_n // tn,)

    bf16, f32 = jnp.bfloat16, jnp.float32

    # Transposed, lane-dense activation layout (batch on the 128-lane axis).
    x_t = (x if x_is_transposed else x.T).astype(bf16)
    if padded_n != n:
        # Padded columns compute relu(bias) garbage in enc/risk; it is sliced off below.
        # This is intentional (cheaper than masking in-kernel).
        x_t = jnp.pad(x_t, ((0, 0), (0, padded_n - n)))

    # ---- pack the 8 tiny resident operands into 2 slabs -> 3 input streams total.
    cw = max(f, d1, d2)
    r1, r2, r3 = _round_up(d1, 8), _round_up(d2, 8), _round_up(d3, 8)
    w_offs = (0, r1, r1 + r2)
    w_slab = jnp.concatenate([
        _pad2d(params["we1"].T.astype(bf16), r1, cw),     # [D1, F]
        _pad2d(params["we2"].T.astype(bf16), r2, cw),     # [D2, D1]
        _pad2d(params["wp1"].T.astype(bf16), r3, cw),     # [D3, D2]
    ], axis=0)

    b_offs = (0, r1, r1 + r2, r1 + r2 + r3, r1 + r2 + 2 * r3)
    b_slab = jnp.concatenate([
        _pad2d(params["be1"].reshape(d1, 1).astype(f32), r1, 1),
        _pad2d(params["be2"].reshape(d2, 1).astype(f32), r2, 1),
        _pad2d(params["bp1"].reshape(d3, 1).astype(f32), r3, 1),
        _pad2d(params["wp2"].astype(f32), r3, 1),
        _pad2d(params["bp2"].reshape(1, 1).astype(f32), 8, 1),
    ], axis=0)

    kernel = _make_swsa_kernel(f, d1, d2, d3, w_offs, b_offs)

    resident = lambda i: (0, 0)   # weight/bias slabs stay VMEM-resident across the grid
    tiled = lambda i: (0, i)      # batch-tiled activations

    risk_t, enc_t = pl.pallas_call(
        kernel,
        grid=grid,
        in_specs=[
            pl.BlockSpec((f, tn), tiled),          # x (transposed, bf16)
            pl.BlockSpec(w_slab.shape, resident),  # packed bf16 weights
            pl.BlockSpec(b_slab.shape, resident),  # packed f32 biases + wp2
        ],
        out_specs=(
            pl.BlockSpec((1, tn), tiled),          # risk_pred (transposed)
            pl.BlockSpec((d2, tn), tiled),         # encoding_var (transposed, bf16)
        ),
        out_shape=(
            jax.ShapeDtypeStruct((1, padded_n), f32),
            jax.ShapeDtypeStruct((d2, padded_n), bf16),
        ),
        compiler_params=pltpu.CompilerParams(
            dimension_semantics=("parallel",),      # shard row tiles across TCs (v7x)
            # Not the binding constraint (working set is a few MiB even at tn=8192).
            vmem_limit_bytes=32 * 1024 * 1024,
        ),
    )(x_t, w_slab, b_slab)

    if transposed_outputs:
        return risk_t[:, :n], enc_t[:, :n]
    # Layout plumbing only (use transposed_outputs=True to avoid these HBM passes when
    # the consumer can take [D, N] slabs directly).
    return risk_t[:, :n].T, enc_t[:, :n].T


def init_params(key, input_dim, encode_dims, predict_dims):
    """Deterministic synthetic parameter init (normal * 0.1, zero bias)."""
    dims_enc = [input_dim] + list(encode_dims)
    dims_pred = [encode_dims[-1]] + list(predict_dims)
    keys = jax.random.split(key, 4)
    params = {}
    # encoder: 2 layers, weights stored [in_dim, out_dim]
    params["we1"] = 0.1 * jax.random.normal(keys[0], (dims_enc[0], dims_enc[1]), jnp.float32)
    params["be1"] = jnp.zeros((1, dims_enc[1]), jnp.float32)
    params["we2"] = 0.1 * jax.random.normal(keys[1], (dims_enc[1], dims_enc[2]), jnp.float32)
    params["be2"] = jnp.zeros((1, dims_enc[2]), jnp.float32)
    # predictor: 2 layers (final output dim = predict_dims[-1] = 1)
    params["wp1"] = 0.1 * jax.random.normal(keys[2], (dims_pred[0], dims_pred[1]), jnp.float32)
    params["bp1"] = jnp.zeros((1, dims_pred[1]), jnp.float32)
    params["wp2"] = 0.1 * jax.random.normal(keys[3], (dims_pred[1], dims_pred[2]), jnp.float32)
    params["bp2"] = jnp.zeros((1, dims_pred[2]), jnp.float32)
    # con_W / cen_W exist in the module but are unused by forward.
    return params


def reference_forward(x, p):
    """Pure-JAX reference with the same bf16-operand / f32-accumulate recipe."""
    bf16, f32 = jnp.bfloat16, jnp.float32
    h1 = jnp.maximum(jnp.dot(x.astype(bf16), p["we1"].astype(bf16),
                             preferred_element_type=f32) + p["be1"], 0.0)
    enc = jnp.maximum(jnp.dot(h1.astype(bf16), p["we2"].astype(bf16),
                              preferred_element_type=f32) + p["be2"], 0.0)
    p1 = jnp.maximum(jnp.dot(enc.astype(bf16), p["wp1"].astype(bf16),
                             preferred_element_type=f32) + p["bp1"], 0.0)
    risk = jnp.sum(p1 * p["wp2"].T, axis=-1, keepdims=True) + p["bp2"]
    return risk, enc


if __name__ == "__main__":
    key = jax.random.PRNGKey(0)
    k_x, k_p = jax.random.split(key)

    sampleNbr = 300          # not a multiple of 128 -> exercises tile padding
    input_dim = 32           # tabular feature dim
    encode_dims = [32, 16]   # config['network']['encode_dims']
    predict_dims = [8, 1]    # config['network']['predict_dims']

    x = jax.random.normal(k_x, (sampleNbr, input_dim), jnp.float32)
    params = init_params(k_p, input_dim, encode_dims, predict_dims)

    # With N=300 the min_grid_steps=2 cap clamps tn to 128 -> grid of 3 row tiles
    # (exercises the pipeline and the padded-tail handling).
    risk_pred, encoding_var = swsa_forward(x, params, block_n=4096)
    jax.block_until_ready((risk_pred, encoding_var))

    # sanity-check against a pure-JAX reference using the same bf16 matmul recipe
    # (encoding_var comes back bf16; compare in f32 with a bf16-appropriate tolerance)
    risk_ref, enc_ref = reference_forward(x, params)
    assert risk_pred.shape == (sampleNbr, predict_dims[-1])
    assert encoding_var.shape == (sampleNbr, encode_dims[-1])
    assert jnp.allclose(encoding_var.astype(jnp.float32), enc_ref, atol=2e-2, rtol=2e-2)
    assert jnp.allclose(risk_pred, risk_ref, atol=1e-2, rtol=1e-2)

    print("KERNEL_OK")
</pallas_src>

<mosaic_0001>
module attributes {stable_mosaic.version = 11 : i64} {
  func.func @kernel(%arg0: i32, %arg1: memref<32x128xbf16, #tpu.memory_space<vmem>>, %arg2: memref<56x32xbf16, #tpu.memory_space<vmem>>, %arg3: memref<72x1xf32, #tpu.memory_space<vmem>>, %arg4: memref<1x128xf32, #tpu.memory_space<vmem>>, %arg5: memref<16x128xbf16, #tpu.memory_space<vmem>>) attributes {dimension_semantics = [#tpu.dimension_semantics<parallel>], iteration_bounds = array<i64: 3>, scalar_prefetch = 0 : i64, scratch_operands = 0 : i64, tpu.core_type = #tpu.core_type<tc>, window_params = [{transform_indices = @transform_0, window_bounds = array<i64: 32, 128>}, {pipeline_mode = #tpu.pipeline_mode<synchronous>, transform_indices = @transform_1, window_bounds = array<i64: 56, 32>}, {pipeline_mode = #tpu.pipeline_mode<synchronous>, transform_indices = @transform_2, window_bounds = array<i64: 72, 1>}, {transform_indices = @transform_3, window_bounds = array<i64: 1, 128>}, {transform_indices = @transform_4, window_bounds = array<i64: 16, 128>}]} {
    %c0 = arith.constant 0 : index
    %c0_0 = arith.constant 0 : index
    %0 = vector.load %arg1[%c0, %c0_0] : memref<32x128xbf16, #tpu.memory_space<vmem>>, vector<32x128xbf16>
    %c0_1 = arith.constant 0 : index
    %c0_2 = arith.constant 0 : index
    %1 = vector.load %arg2[%c0_1, %c0_2] : memref<56x32xbf16, #tpu.memory_space<vmem>>, vector<56x32xbf16>
    %c0_3 = arith.constant 0 : index
    %c0_4 = arith.constant 0 : index
    %2 = vector.load %arg3[%c0_3, %c0_4] : memref<72x1xf32, #tpu.memory_space<vmem>>, vector<72x1xf32>
    %3 = vector.extract_strided_slice %1 {offsets = [0, 0], sizes = [32, 32], strides = [1, 1]} : vector<56x32xbf16> to vector<32x32xbf16>
    %4 = vector.extract_strided_slice %1 {offsets = [32, 0], sizes = [16, 32], strides = [1, 1]} : vector<56x32xbf16> to vector<16x32xbf16>
    %5 = vector.extract_strided_slice %1 {offsets = [48, 0], sizes = [8, 16], strides = [1, 1]} : vector<56x32xbf16> to vector<8x16xbf16>
    %6 = vector.extract_strided_slice %2 {offsets = [0, 0], sizes = [32, 1], strides = [1, 1]} : vector<72x1xf32> to vector<32x1xf32>
    %7 = vector.extract_strided_slice %2 {offsets = [32, 0], sizes = [16, 1], strides = [1, 1]} : vector<72x1xf32> to vector<16x1xf32>
    %8 = vector.extract_strided_slice %2 {offsets = [48, 0], sizes = [8, 1], strides = [1, 1]} : vector<72x1xf32> to vector<8x1xf32>
    %9 = vector.extract_strided_slice %2 {offsets = [56, 0], sizes = [8, 1], strides = [1, 1]} : vector<72x1xf32> to vector<8x1xf32>
    %10 = vector.extract_strided_slice %2 {offsets = [64, 0], sizes = [1, 1], strides = [1, 1]} : vector<72x1xf32> to vector<1x1xf32>
    %cst = arith.constant dense<0.000000e+00> : vector<32x128xf32>
    %11 = tpu.matmul %3, %0, %cst {dimension_numbers = #tpu.dot_dimension_numbers<[1], [0], [0], [1], [0, 0, 1, 1], [], []>} : vector<32x32xbf16>, vector<32x128xbf16>, vector<32x128xf32> -> vector<32x128xf32>
    %12 = vector.broadcast %6 : vector<32x1xf32> to vector<32x128xf32>
    %13 = arith.addf %11, %12 : vector<32x128xf32>
    %cst_5 = arith.constant 0.000000e+00 : f32
    %14 = vector.broadcast %cst_5 : f32 to vector<32x128xf32>
    %15 = arith.maximumf %13, %14 : vector<32x128xf32>
    %16 = arith.truncf %15 : vector<32x128xf32> to vector<32x128xbf16>
    %cst_6 = arith.constant dense<0.000000e+00> : vector<16x128xf32>
    %17 = tpu.matmul %4, %16, %cst_6 {dimension_numbers = #tpu.dot_dimension_numbers<[1], [0], [0], [1], [0, 0, 1, 1], [], []>} : vector<16x32xbf16>, vector<32x128xbf16>, vector<16x128xf32> -> vector<16x128xf32>
    %18 = vector.broadcast %7 : vector<16x1xf32> to vector<16x128xf32>
    %19 = arith.addf %17, %18 : vector<16x128xf32>
    %cst_7 = arith.constant 0.000000e+00 : f32
    %20 = vector.broadcast %cst_7 : f32 to vector<16x128xf32>
    %21 = arith.maximumf %19, %20 : vector<16x128xf32>
    %22 = arith.truncf %21 : vector<16x128xf32> to vector<16x128xbf16>
    %c0_8 = arith.constant 0 : index
    %c0_9 = arith.constant 0 : index
    %23 = vector.load %arg5[%c0_8, %c0_9] : memref<16x128xbf16, #tpu.memory_space<vmem>>, vector<16x128xbf16>
    tpu.vector_store %arg5[%c0_8, %c0_9], %22 {strides = array<i32>} : memref<16x128xbf16, #tpu.memory_space<vmem>>, vector<16x128xbf16>,
    %cst_10 = arith.constant dense<0.000000e+00> : vector<8x128xf32>
    %24 = tpu.matmul %5, %22, %cst_10 {dimension_numbers = #tpu.dot_dimension_numbers<[1], [0], [0], [1], [0, 0, 1, 1], [], []>} : vector<8x16xbf16>, vector<16x128xbf16>, vector<8x128xf32> -> vector<8x128xf32>
    %25 = vector.broadcast %8 : vector<8x1xf32> to vector<8x128xf32>
    %26 = arith.addf %24, %25 : vector<8x128xf32>
    %cst_11 = arith.constant 0.000000e+00 : f32
    %27 = vector.broadcast %cst_11 : f32 to vector<8x128xf32>
    %28 = arith.maximumf %26, %27 : vector<8x128xf32>
    %29 = vector.broadcast %9 : vector<8x1xf32> to vector<8x128xf32>
    %30 = arith.mulf %28, %29 : vector<8x128xf32>
    %cst_12 = arith.constant dense<0.000000e+00> : vector<128xf32>
    %31 = vector.multi_reduction <add>, %30, %cst_12 [0] : vector<8x128xf32> to vector<128xf32>
    %32 = vector.shape_cast %31 : vector<128xf32> to vector<1x128xf32>
    %33 = vector.broadcast %10 : vector<1x1xf32> to vector<1x128xf32>
    %34 = arith.addf %32, %33 : vector<1x128xf32>
    %c0_13 = arith.constant 0 : index
    %c0_14 = arith.constant 0 : index
    %35 = vector.load %arg4[%c0_13, %c0_14] : memref<1x128xf32, #tpu.memory_space<vmem>>, vector<1x128xf32>
    tpu.vector_store %arg4[%c0_13, %c0_14], %34 {strides = array<i32>} : memref<1x128xf32, #tpu.memory_space<vmem>>, vector<1x128xf32>,
    return
  }
  func.func @transform_0(%arg0: i32) -> (i32, i32) {
    %c0_i32 = arith.constant 0 : i32
    %c0_i32_0 = arith.constant 0 : i32
    return %c0_i32, %arg0 : i32, i32
  }
  func.func @transform_1(%arg0: i32) -> (i32, i32) {
    %c0_i32 = arith.constant 0 : i32
    %c0_i32_0 = arith.constant 0 : i32
    %c0_i32_1 = arith.constant 0 : i32
    return %c0_i32, %c0_i32_0 : i32, i32
  }
  func.func @transform_2(%arg0: i32) -> (i32, i32) {
    %c0_i32 = arith.constant 0 : i32
    %c0_i32_0 = arith.constant 0 : i32
    %c0_i32_1 = arith.constant 0 : i32
    return %c0_i32, %c0_i32_0 : i32, i32
  }
  func.func @transform_3(%arg0: i32) -> (i32, i32) {
    %c0_i32 = arith.constant 0 : i32
    %c0_i32_0 = arith.constant 0 : i32
    return %c0_i32, %arg0 : i32, i32
  }
  func.func @transform_4(%arg0: i32) -> (i32, i32) {
    %c0_i32 = arith.constant 0 : i32
    %c0_i32_0 = arith.constant 0 : i32
    return %c0_i32, %arg0 : i32, i32
  }
}

</mosaic_0001>

<llo_original>
// kernel: tpu_custom_call.1
$region0: #{tpu_custom_call.1}
  #allocation0 [shape = 'u32[]', space=smem, size = 0x4, offset = 0x4, fixed_abs, tag = 'smem constant byte address 0x4 - core index']
  #allocation1 [shape = 'u32[144,128]{1,0:T(1,128)}', space=vmem, size = 0x12000, scoped, tag = 'internal scratch']
  %s0 = inlined_call_operand.vmem [shape: bf16[32,384], index: 0, kind: input, shape index: {}]
  %s1 = inlined_call_operand.vmem [shape: bf16[56,32], index: 1, kind: input, shape index: {}]
  %s2 = inlined_call_operand.vmem [shape: f32[72,1], index: 2, kind: input, shape index: {}]
  %s3 = inlined_call_operand.hbm [shape: f32[1,384], index: 3, kind: output, shape index: {0}]
  %s4 = inlined_call_operand.hbm [shape: bf16[16,384], index: 4, kind: output, shape index: {1}]
  %5 = xla_tuple %s3, %s4
  %s6 = sld [smem:[#allocation0]]
  $region94: #{tpu_custom_call.1} parent=0
    _
  %s8 = ssub.s32 1, %s6
  %s9 = scalar_select 0, %s8, %s6
  $region1: #{tpu_custom_call.1} parent=0
    #allocation2 [shape = 'u8[16384]{0}', space=vmem, size = 0x4000, scoped, tag = 'input window, operand 0']
    #allocation3 [shape = 'u8[1024]{0}', space=vmem, size = 0x400, scoped, tag = 'output window, operand 0']
    #allocation4 [shape = 's32[2]{0}', space=sflag, size = 0x8, scoped, tag = 'scoped memory for tpu_custom_call.1']
    #allocation5 [shape = 'u8[8192]{0}', space=vmem, size = 0x2000, scoped, tag = 'output window, operand 1']
    #allocation6 [shape = 's32[2]{0}', space=sflag, size = 0x8, scoped, tag = 'scoped memory for tpu_custom_call.1']
    %10 = vsyncpa [#allocation4], 0
    %s11 = scalar_lea.sflag [#allocation4], 1
    %12 = vsyncpa %s11, 0
    %13 = vsyncpa [#allocation6], 0
    %s14 = scalar_lea.sflag [#allocation6], 1
    %15 = vsyncpa %s14, 0
    loop: start=0, step=1, limit=5
    $region2: #{tpu_custom_call.1} parent=1 // loop_pre_header
      _
    $region3: #{tpu_custom_call.1} parent=1 // loop_header
      %s17 = sphi 0, %s21
      %p18 = scmp.ge.s32.totalorder %s17, 5
      %s27 = sphi 0, %s29
      %s30 = sphi 0, %s27
      %s31 = sphi 0, %s30
      %s47 = sphi 0, %s31
      %s51 = sphi 0, %s51
      %s53 = sphi 0, %s51
      %s54 = sphi 0, %s53
      %s68 = sphi 0, %s54
      %s72 = sphi 0, %s72
      %s74 = sphi 0, %s72
      %s75 = sphi 0, %s74
      %s89 = sphi 0, %s75
      %s95 = sphi 0, %s97
      %s98 = sphi 0, %s95
      %s99 = sphi 0, %s98
      %s115 = sphi 0, %s99
      %s121 = sphi 0, %s123
      %s124 = sphi 0, %s121
      %s125 = sphi 0, %s124
      %s141 = sphi 0, %s125
    $region4: #{tpu_custom_call.1} parent=1 // loop_header_branch
      %20 = sbr.rel (%p18) target = $region8
    $region5: #{tpu_custom_call.1} parent=1 // loop_body
      %s22 = ssub.s32 %s17, 1
      %s23 = ssub.s32 %s17, 2
      %s24 = sadd.s32 %s17, 1
      %s25 = ssub.s32 %s17, %s24
      %p26 = scmp.eq.s32.totalorder %s25, 0
      %s28 = sadd.s32 %s27, 1
      %s29 = scalar_select %p26, %s27, %s28
      %p32 = pneg %p26
      %p33 = scmp.eq.s32.totalorder %s17, 2
      %p34 = por %p32, %p33
      %p35 = scmp.ne.s32.totalorder %s27, %s30
      %p36 = scmp.eq.s32.totalorder %s17, 0
      %p37 = por %p35, %p36
      %p38 = scmp.ne.s32.totalorder %s27, %s30
      %p39 = scmp.eq.s32.totalorder %s22, 2
      %p40 = por %p38, %p39
      %p41 = scmp.ne.s32.totalorder %s30, %s31
      %p42 = scmp.eq.s32.totalorder %s22, 0
      %p43 = por %p41, %p42
      %p44 = scmp.ne.s32.totalorder %s30, %s31
      %p45 = scmp.eq.s32.totalorder %s23, 2
      %p46 = por %p44, %p45
      %p48 = scmp.ne.s32.totalorder %s31, %s47
      %p49 = scmp.eq.s32.totalorder %s23, 0
      %p50 = por %p48, %p49
      %s52 = sadd.s32 %s51, 1
      %p55 = scmp.eq.s32.totalorder %s17, 2
      %p56 = scmp.ne.s32.totalorder %s51, %s53
      %p57 = scmp.eq.s32.totalorder %s17, 0
      %p58 = por %p56, %p57
      %p59 = scmp.ne.s32.totalorder %s51, %s53
      %p60 = scmp.eq.s32.totalorder %s22, 2
      %p61 = por %p59, %p60
      %p62 = scmp.ne.s32.totalorder %s53, %s54
      %p63 = scmp.eq.s32.totalorder %s22, 0
      %p64 = por %p62, %p63
      %p65 = scmp.ne.s32.totalorder %s53, %s54
      %p66 = scmp.eq.s32.totalorder %s23, 2
      %p67 = por %p65, %p66
      %p69 = scmp.ne.s32.totalorder %s54, %s68
      %p70 = scmp.eq.s32.totalorder %s23, 0
      %p71 = por %p69, %p70
      %s73 = sadd.s32 %s72, 1
      %p76 = scmp.eq.s32.totalorder %s17, 2
      %p77 = scmp.ne.s32.totalorder %s72, %s74
      %p78 = scmp.eq.s32.totalorder %s17, 0
      %p79 = por %p77, %p78
      %p80 = scmp.ne.s32.totalorder %s72, %s74
      %p81 = scmp.eq.s32.totalorder %s22, 2
      %p82 = por %p80, %p81
      %p83 = scmp.ne.s32.totalorder %s74, %s75
      %p84 = scmp.eq.s32.totalorder %s22, 0
      %p85 = por %p83, %p84
      %p86 = scmp.ne.s32.totalorder %s74, %s75
      %p87 = scmp.eq.s32.totalorder %s23, 2
      %p88 = por %p86, %p87
      %p90 = scmp.ne.s32.totalorder %s75, %s89
      %p91 = scmp.eq.s32.totalorder %s23, 0
      %p92 = por %p90, %p91
      %s93 = ssub.s32 %s17, %s24
      %p94 = scmp.eq.s32.totalorder %s93, 0
      %s96 = sadd.s32 %s95, 1
      %s97 = scalar_select %p94, %s95, %s96
      %p100 = pneg %p94
      %p101 = scmp.eq.s32.totalorder %s17, 2
      %p102 = por %p100, %p101
      %p103 = scmp.ne.s32.totalorder %s95, %s98
      %p104 = scmp.eq.s32.totalorder %s17, 0
      %p105 = por %p103, %p104
      %p106 = scmp.ne.s32.totalorder %s95, %s98
      %p107 = scmp.eq.s32.totalorder %s22, 2
      %p108 = por %p106, %p107
      %p109 = scmp.ne.s32.totalorder %s98, %s99
      %p110 = scmp.eq.s32.totalorder %s22, 0
      %p111 = por %p109, %p110
      %p112 = scmp.ne.s32.totalorder %s98, %s99
      %p113 = scmp.eq.s32.totalorder %s23, 2
      %p114 = por %p112, %p113
      %p116 = scmp.ne.s32.totalorder %s99, %s115
      %p117 = scmp.eq.s32.totalorder %s23, 0
      %p118 = por %p116, %p117
      %s119 = ssub.s32 %s17, %s24
      %p120 = scmp.eq.s32.totalorder %s119, 0
      %s122 = sadd.s32 %s121, 1
      %s123 = scalar_select %p120, %s121, %s122
      %p126 = pneg %p120
      %p127 = scmp.eq.s32.totalorder %s17, 2
      %p128 = por %p126, %p127
      %p129 = scmp.ne.s32.totalorder %s121, %s124
      %p130 = scmp.eq.s32.totalorder %s17, 0
      %p131 = por %p129, %p130
      %p132 = scmp.ne.s32.totalorder %s121, %s124
      %p133 = scmp.eq.s32.totalorder %s22, 2
      %p134 = por %p132, %p133
      %p135 = scmp.ne.s32.totalorder %s124, %s125
      %p136 = scmp.eq.s32.totalorder %s22, 0
      %p137 = por %p135, %p136
      %p138 = scmp.ne.s32.totalorder %s124, %s125
      %p139 = scmp.eq.s32.totalorder %s23, 2
      %p140 = por %p138, %p139
      %p142 = scmp.ne.s32.totalorder %s125, %s141
      %p143 = scmp.eq.s32.totalorder %s23, 0
      %p144 = por %p142, %p143
      %p145 = scmp.le.s32.totalorder 1, %s17
      %p146 = scmp.lt.s32.totalorder %s17, 4
      %p147 = pnand %p145, %p146
      %p148 = pneg %p147
      // Predicated region
      $region9: #{tpu_custom_call.1} parent=5 // pred_check
        _
      $region10: #{tpu_custom_call.1} parent=5 // pred_check_branch
        %150 = sbr.rel (%p147) target = $region12
      $region11: #{tpu_custom_call.1} parent=5 // pred_region
        %s151 = ssub.s32 %s17, 1
        // Predicated region
        $region13: #{tpu_custom_call.1} parent=11 // pred_check
          %p152 = pneg %p64
        $region14: #{tpu_custom_call.1} parent=11 // pred_check_branch
          %154 = sbr.rel (%p152) target = $region16
        $region15: #{tpu_custom_call.1} parent=11 // pred_region
          _
        $region16: #{tpu_custom_call.1} parent=11 // pred_fallthru
          _
        // Predicated region
        $region17: #{tpu_custom_call.1} parent=11 // pred_check
          %p155 = pneg %p85
        $region18: #{tpu_custom_call.1} parent=11 // pred_check_branch
          %157 = sbr.rel (%p155) target = $region20
        $region19: #{tpu_custom_call.1} parent=11 // pred_region
          _
        $region20: #{tpu_custom_call.1} parent=11 // pred_fallthru
          _
      $region12: #{tpu_custom_call.1} parent=5 // pred_fallthru
        _
      %p158 = scmp.lt.s32.totalorder %s17, 3
      // Predicated region
      $region21: #{tpu_custom_call.1} parent=5 // pred_check
        %p159 = pneg %p158
      $region22: #{tpu_custom_call.1} parent=5 // pred_check_branch
        %161 = sbr.rel (%p159) target = $region24
      $region23: #{tpu_custom_call.1} parent=5 // pred_region
        // Predicated region
        $region25: #{tpu_custom_call.1} parent=23 // pred_check
          %p162 = pneg %p37
        $region26: #{tpu_custom_call.1} parent=23 // pred_check_branch
          %164 = sbr.rel (%p162) target = $region28
        $region27: #{tpu_custom_call.1} parent=23 // pred_region
          %s165 = sand.u32 %s27, 1
          %s166 = sand.u32 %s27, 1
          %s167 = smul.addr %s166, 16
          %s168 = scalar_lea.vmem [#allocation2], %s167
          %s169 = smul.addr %s17, 4
          %s170 = scalar_lea.vmem %s0, %s169
          // Predicated region
          $region29: #{tpu_custom_call.1} parent=27 // pred_check
            _
          $region30: #{tpu_custom_call.1} parent=27 // pred_check_branch
            %172 = sbr.rel (0) target = $region32
          $region31: #{tpu_custom_call.1} parent=27 // pred_region
            // Predicated region
            $region33: #{tpu_custom_call.1} parent=31 // pred_check
              _
            $region34: #{tpu_custom_call.1} parent=31 // pred_check_branch
              %174 = sbr.rel target = $region36
            $region35: #{tpu_custom_call.1} parent=31 // pred_region
              // Predicated region
              $region48: #{tpu_custom_call.1} parent=35 // pred_check
                _
              $region49: #{tpu_custom_call.1} parent=35 // pred_check_branch
                %195 = sbr.rel (0) target = $region51
              $region50: #{tpu_custom_call.1} parent=35 // pred_region
                loop: start=0, step=1, limit=1
                $region52: #{tpu_custom_call.1} parent=50 // loop_pre_header
                  _
                $region53: #{tpu_custom_call.1} parent=50 // loop_header
                  %s197 = sphi 0, %s201
                  %p198 = scmp.ge.s32.totalorder %s197, 1
                  %s202 = sphi %s170, %s170
                  %s203 = sphi %s168, %s168
                $region54: #{tpu_custom_call.1} parent=50 // loop_header_branch
                  %200 = sbr.rel (%p198) target = $region58
                $region55: #{tpu_custom_call.1} parent=50 // loop_body
                  _
                $region56: #{tpu_custom_call.1} parent=50 // loop_footer
                  %s201 = sadd.s32 1, %s197
                $region57: #{tpu_custom_call.1} parent=50 // loop_footer_branch
                  %196 = sbr.rel target = $region53
                $region58: #{tpu_custom_call.1} parent=50 // loop_exit
                  _
                loop: start=0, step=1, limit=1
                $region59: #{tpu_custom_call.1} parent=50 // loop_pre_header
                  _
                $region60: #{tpu_custom_call.1} parent=50 // loop_header
                  %s206 = sphi 0, %s210
                  %p207 = scmp.ge.s32.totalorder %s206, 1
                  %s211 = sphi %s170, %s170
                  %s212 = sphi %s168, %s168
                $region61: #{tpu_custom_call.1} parent=50 // loop_header_branch
                  %209 = sbr.rel (%p207) target = $region65
                $region62: #{tpu_custom_call.1} parent=50 // loop_body
                  %v213 = vld [vmem:[%s211] sm:$0xf]
                  %214 = vst [vmem:[%s212] sm:$0xf] %v213
                  %v215 = vld [vmem:[%s211 + $0xc] sm:$0xf]
                  %216 = vst [vmem:[%s212 + $0x4] sm:$0xf] %v215
                  %v217 = vld [vmem:[%s211 + $0x18] sm:$0xf]
                  %218 = vst [vmem:[%s212 + $0x8] sm:$0xf] %v217
                  %v219 = vld [vmem:[%s211 + $0x24] sm:$0xf]
                  %220 = vst [vmem:[%s212 + $0xc] sm:$0xf] %v219
                $region63: #{tpu_custom_call.1} parent=50 // loop_footer
                  %s210 = sadd.s32 1, %s206
                $region64: #{tpu_custom_call.1} parent=50 // loop_footer_branch
                  %205 = sbr.rel target = $region60
                $region65: #{tpu_custom_call.1} parent=50 // loop_exit
                  _
              $region51: #{tpu_custom_call.1} parent=35 // pred_fallthru
                _
            $region36: #{tpu_custom_call.1} parent=31 // pred_fallthru
              _
            // Predicated region
            $region37: #{tpu_custom_call.1} parent=31 // pred_check
              _
            $region38: #{tpu_custom_call.1} parent=31 // pred_check_branch
              %176 = sbr.rel (0) target = $region40
            $region39: #{tpu_custom_call.1} parent=31 // pred_region
              loop: start=0, step=1, limit=1
              $region41: #{tpu_custom_call.1} parent=39 // loop_pre_header
                _
              $region42: #{tpu_custom_call.1} parent=39 // loop_header
                %s179 = sphi 0, %s183
                %p180 = scmp.ge.s32.totalorder %s179, 1
                %s184 = sphi %s170, %s170
                %s185 = sphi %s168, %s168
              $region43: #{tpu_custom_call.1} parent=39 // loop_header_branch
                %182 = sbr.rel (%p180) target = $region47
              $region44: #{tpu_custom_call.1} parent=39 // loop_body
                %v186 = vld [vmem:[%s184] sm:$0xf]
                %187 = vst [vmem:[%s185] sm:$0xf] %v186
                %v188 = vld [vmem:[%s184 + $0xc] sm:$0xf]
                %189 = vst [vmem:[%s185 + $0x4] sm:$0xf] %v188
                %v190 = vld [vmem:[%s184 + $0x18] sm:$0xf]
                %191 = vst [vmem:[%s185 + $0x8] sm:$0xf] %v190
                %v192 = vld [vmem:[%s184 + $0x24] sm:$0xf]
                %193 = vst [vmem:[%s185 + $0xc] sm:$0xf] %v192
              $region45: #{tpu_custom_call.1} parent=39 // loop_footer
                %s183 = sadd.s32 1, %s179
              $region46: #{tpu_custom_call.1} parent=39 // loop_footer_branch
                %178 = sbr.rel target = $region42
              $region47: #{tpu_custom_call.1} parent=39 // loop_exit
                _
            $region40: #{tpu_custom_call.1} parent=31 // pred_fallthru
              _
          $region32: #{tpu_custom_call.1} parent=27 // pred_fallthru
            _
          %221 = vnop
        $region28: #{tpu_custom_call.1} parent=23 // pred_fallthru
          _
      $region24: #{tpu_custom_call.1} parent=5 // pred_fallthru
        _
      %p222 = scmp.le.s32.totalorder 1, %s17
      %p223 = scmp.lt.s32.totalorder %s17, 4
      %p224 = pnand %p222, %p223
      %p225 = pneg %p224
      // Predicated region
      $region66: #{tpu_custom_call.1} parent=5 // pred_check
        _
      $region67: #{tpu_custom_call.1} parent=5 // pred_check_branch
        %227 = sbr.rel (%p224) target = $region69
      $region68: #{tpu_custom_call.1} parent=5 // pred_region
        %s228 = ssub.s32 %s17, 1
        %s229 = sand.u32 %s30, 1
        %s230 = sand.u32 %s30, 1
        %s231 = smul.addr %s230, 16
        %s232 = scalar_lea.vmem [#allocation2], %s231
        // Predicated region
        $region70: #{tpu_custom_call.1} parent=68 // pred_check
          %p233 = pneg %p43
        $region71: #{tpu_custom_call.1} parent=68 // pred_check_branch
          %235 = sbr.rel (%p233) target = $region73
        $region72: #{tpu_custom_call.1} parent=68 // pred_region
          _
        $region73: #{tpu_custom_call.1} parent=68 // pred_fallthru
          _
        %s236 = sand.u32 %s30, 1
        %s237 = sand.u32 %s30, 1
        %s238 = smul.addr %s237, 16
        %s239 = scalar_lea.vmem [#allocation2], %s238
        %p240 = pneg %p43
        %p241 = pneg %p40
        %p242 = pneg %p64
        %p243 = pneg %p61
        %p244 = pneg %p85
        %p245 = pneg %p82
        %p246 = pneg %p111
        %p247 = pneg %p108
        %s248 = sand.u32 %s98, 1
        %s249 = scalar_lea.sflag [#allocation4], %s248
        %s250 = sand.u32 %s98, 1
        %s251 = scalar_lea.vmem [#allocation3], %s250
        %p252 = pneg %p137
        %p253 = pneg %p134
        %s254 = sand.u32 %s124, 1
        %s255 = scalar_lea.sflag [#allocation6], %s254
        %s256 = sand.u32 %s124, 1
        %s257 = smul.addr %s256, 8
        %s258 = scalar_lea.vmem [#allocation5], %s257
        %v260 = vld [vmem:[%s232] sm:$0xf]
        %v261 = vld [vmem:[%s232 + $0x4] sm:$0xf]
        %v262 = vld [vmem:[%s232 + $0x8] sm:$0xf]
        %v263 = vld [vmem:[%s232 + $0xc] sm:$0xf]
        %v264 = vld [vmem:[%s1] sm:$0xf]
        %v265 = vld [vmem:[%s1 + $0x4] sm:$0xf]
        %v266 = vld [vmem:[%s1 + $0x8] sm:$0xf]
        %v267 = vld [vmem:[%s1 + $0xc] sm:$0xf]
        %v268 = vld [vmem:[%s1 + $0x10] sm:$0xf]
        %v269 = vld [vmem:[%s1 + $0x14] sm:$0xf]
        %v270 = vld [vmem:[%s1 + $0x18] sm:$0xf]
        %v271 = vld [vmem:[%s2] sm:$0xff]
        %v272 = vld [vmem:[%s2 + $0x8] sm:$0xff]
        %v273 = vld [vmem:[%s2 + $0x10] sm:$0xff]
        %v274 = vld [vmem:[%s2 + $0x18] sm:$0xff]
        %v275 = vld [vmem:[%s2 + $0x20] sm:$0xff]
        %v276 = vld [vmem:[%s2 + $0x28] sm:$0xff]
        %v277 = vld [vmem:[%s2 + $0x30] sm:$0xff]
        %v278 = vld [vmem:[%s2 + $0x38] sm:$0xff]
        %v279 = vld [vmem:[%s2 + $0x40] sm:$0xff]
        %281 = vset.pattern.permute.xlu0 0
        %282 = vperm.xlu0 %281, %v271
        %v283 = vpop.permute.xlu0 %282
        %286 = vset.pattern.permute.xlu0 0
        %287 = vperm.xlu0 %286, %v272
        %v288 = vpop.permute.xlu0 %287
        %291 = vset.pattern.permute.xlu0 0
        %292 = vperm.xlu0 %291, %v273
        %v293 = vpop.permute.xlu0 %292
        %296 = vset.pattern.permute.xlu0 0
        %297 = vperm.xlu0 %296, %v274
        %v298 = vpop.permute.xlu0 %297
        %v304 = vunpack.c.l.b16 %v264
        %v305 = vunpack.c.l.b16 %v265
        %v306 = vunpack.c.l.b16 %v266
        %v307 = vunpack.c.l.b16 %v267
        %v308 = vpack.c.b16 %v305, %v304
        %v309 = vpack.c.b16 %v307, %v306
        %v314 = vunpack.c.l.b16 %v260
        %v315 = vunpack.c.l.b16 %v261
        %v316 = vunpack.c.l.b16 %v262
        %v317 = vunpack.c.l.b16 %v263
        %v318 = vpack.c.b16 %v315, %v314
        %v319 = vpack.c.b16 %v317, %v316
        %vm322 = vcmask 261120
        %v324 = vsel %vm322, %v308, 0
        %v327 = vsel %vm322, %v309, 0
        %329 = vmatprep.subr.bf16.mxu0 0
        %330 = vmatpush1.bf16.msra.mxu0 %v318
        %331 = vmatprep.subr.bf16.mxu0 0
        %332 = vmatpush1.bf16.msra.mxu0 %v319
        %333 = vmatprep.subr.bf16.mxu0 0
        %334 = vmatpush1.bf16.msra.mxu0 0
        %335 = vmatprep.subr.bf16.mxu0 0
        %336 = vmatpush1.bf16.msra.mxu0 0
        %337 = vmatprep.subr.bf16.mxu0 0
        %338 = vmatpush1.bf16.msra.mxu0 0
        %339 = vmatprep.subr.bf16.mxu0 0
        %340 = vmatpush1.bf16.msra.mxu0 0
        %341 = vmatprep.subr.bf16.mxu0 0
        %342 = vmatpush1.bf16.msra.mxu0 0
        %343 = vmatprep.subr.bf16.mxu0 0
        %344 = vmatpush1.bf16.msra.mxu0 0
        %345 = vmatprep.subr.bf16.mxu0 0
        %346 = vmatpush1.bf16.msra.mxu0 0
        %347 = vmatprep.subr.bf16.mxu0 0
        %348 = vmatpush1.bf16.msra.mxu0 0
        %349 = vmatprep.subr.bf16.mxu0 0
        %350 = vmatpush1.bf16.msra.mxu0 0
        %351 = vmatprep.subr.bf16.mxu0 0
        %352 = vmatpush1.bf16.msra.mxu0 0
        %353 = vmatprep.subr.bf16.mxu0 0
        %354 = vmatpush1.bf16.msra.mxu0 0
        %355 = vmatprep.subr.bf16.mxu0 0
        %356 = vmatpush1.bf16.msra.mxu0 0
        %357 = vmatprep.subr.bf16.mxu0 0
        %358 = vmatpush1.bf16.msra.mxu0 0
        %359 = vmatprep.subr.bf16.mxu0 0
        %360 = vmatpush1.bf16.msra.mxu0 0
        %361 = vmatprep.mubr.bf16.mxu0 0
        %362 = vmatmul.mubr.bf16.gmra.mrb[0].mxu0 %v324
        %v363 = vpop.f32.mrb[0].mxu0
        %v364 = vadd.f32 %v283, %v363
        %v365 = vpop.f32.mrb[0].mxu0
        %v366 = vpop.f32.mrb[0].mxu0
        %v367 = vadd.f32 %v288, %v366
        %v368 = vpop.f32.mrb[0].mxu0
        %369 = vmatprep.mubr.bf16.mxu0 0
        %370 = vmatmul.mubr.bf16.gmra.mrb[0].mxu0 %v327
        %v371 = vpop.f32.mrb[0].mxu0
        %v372 = vadd.f32 %v293, %v371
        %v373 = vpop.f32.mrb[0].mxu0
        %v374 = vpop.f32.mrb[0].mxu0
        %v375 = vadd.f32 %v298, %v374
        %v376 = vpop.f32.mrb[0].mxu0
        %377 = vdwg.mxu0
        %v378 = vmax.f32 %v364, 0.0
        %v379 = vmax.f32 %v367, 0.0
        %v380 = vmax.f32 %v372, 0.0
        %v381 = vmax.f32 %v375, 0.0
        %v382 = vpack.c.bf16 %v379, %v378
        %v383 = vpack.c.bf16 %v381, %v380
        %385 = vset.pattern.permute.xlu0 0
        %386 = vperm.xlu0 %385, %v275
        %v387 = vpop.permute.xlu0 %386
        %390 = vset.pattern.permute.xlu0 0
        %391 = vperm.xlu0 %390, %v276
        %v392 = vpop.permute.xlu0 %391
        %v396 = vunpack.c.l.b16 %v268
        %v397 = vunpack.c.l.b16 %v269
        %v398 = vpack.c.b16 %v397, %v396
        %v400 = vsel %vm322, %v398, 0
        %402 = vmatprep.subr.bf16.mxu0 0
        %403 = vmatpush1.bf16.msra.mxu0 %v382
        %404 = vmatprep.subr.bf16.mxu0 0
        %405 = vmatpush1.bf16.msra.mxu0 %v383
        %406 = vmatprep.subr.bf16.mxu0 0
        %407 = vmatpush1.bf16.msra.mxu0 0
        %408 = vmatprep.subr.bf16.mxu0 0
        %409 = vmatpush1.bf16.msra.mxu0 0
        %410 = vmatprep.subr.bf16.mxu0 0
        %411 = vmatpush1.bf16.msra.mxu0 0
        %412 = vmatprep.subr.bf16.mxu0 0
        %413 = vmatpush1.bf16.msra.mxu0 0
        %414 = vmatprep.subr.bf16.mxu0 0
        %415 = vmatpush1.bf16.msra.mxu0 0
        %416 = vmatprep.subr.bf16.mxu0 0
        %417 = vmatpush1.bf16.msra.mxu0 0
        %418 = vmatprep.subr.bf16.mxu0 0
        %419 = vmatpush1.bf16.msra.mxu0 0
        %420 = vmatprep.subr.bf16.mxu0 0
        %421 = vmatpush1.bf16.msra.mxu0 0
        %422 = vmatprep.subr.bf16.mxu0 0
        %423 = vmatpush1.bf16.msra.mxu0 0
        %424 = vmatprep.subr.bf16.mxu0 0
        %425 = vmatpush1.bf16.msra.mxu0 0
        %426 = vmatprep.subr.bf16.mxu0 0
        %427 = vmatpush1.bf16.msra.mxu0 0
        %428 = vmatprep.subr.bf16.mxu0 0
        %429 = vmatpush1.bf16.msra.mxu0 0
        %430 = vmatprep.subr.bf16.mxu0 0
        %431 = vmatpush1.bf16.msra.mxu0 0
        %432 = vmatprep.subr.bf16.mxu0 0
        %433 = vmatpush1.bf16.msra.mxu0 0
        %434 = vmatprep.mubr.bf16.mxu0 0
        %435 = vmatmul.mubr.bf16.gmra.mrb[0].mxu0 %v400
        %v436 = vpop.f32.mrb[0].mxu0
        %v437 = vadd.f32 %v387, %v436
        %v438 = vpop.f32.mrb[0].mxu0
        %v439 = vpop.f32.mrb[0].mxu0
        %v440 = vadd.f32 %v392, %v439
        %v441 = vpop.f32.mrb[0].mxu0
        %442 = vdwg.mxu0
        %v443 = vmax.f32 %v437, 0.0
        %v444 = vmax.f32 %v440, 0.0
        %v445 = vpack.c.bf16 %v444, %v443
        %v447 = vunpack.c.l.b16 %v445
        %v448 = vunpack.c.h.b16 %v445
        %v449 = vpack.c.b16 %v447, %v447
        %v450 = vpack.c.b16 %v448, %v448
        %453 = vst [vmem:[%s258] sm:$0xf] %v449
        %454 = vst [vmem:[%s258 + $0x4] sm:$0xf] %v450
        %456 = vset.pattern.permute.xlu0 0
        %457 = vperm.xlu0 %456, %v277
        %v458 = vpop.permute.xlu0 %457
        %vm460 = vcmask 130048
        %v462 = vsel %vm460, %v270, 0
        %464 = vmatprep.subr.bf16.mxu0 0
        %465 = vmatpush1.bf16.msra.mxu0 %v445
        %466 = vmatprep.subr.bf16.mxu0 0
        %467 = vmatpush1.bf16.msra.mxu0 0
        %468 = vmatprep.subr.bf16.mxu0 0
        %469 = vmatpush1.bf16.msra.mxu0 0
        %470 = vmatprep.subr.bf16.mxu0 0
        %471 = vmatpush1.bf16.msra.mxu0 0
        %472 = vmatprep.subr.bf16.mxu0 0
        %473 = vmatpush1.bf16.msra.mxu0 0
        %474 = vmatprep.subr.bf16.mxu0 0
        %475 = vmatpush1.bf16.msra.mxu0 0
        %476 = vmatprep.subr.bf16.mxu0 0
        %477 = vmatpush1.bf16.msra.mxu0 0
        %478 = vmatprep.subr.bf16.mxu0 0
        %479 = vmatpush1.bf16.msra.mxu0 0
        %480 = vmatprep.subr.bf16.mxu0 0
        %481 = vmatpush1.bf16.msra.mxu0 0
        %482 = vmatprep.subr.bf16.mxu0 0
        %483 = vmatpush1.bf16.msra.mxu0 0
        %484 = vmatprep.subr.bf16.mxu0 0
        %485 = vmatpush1.bf16.msra.mxu0 0
        %486 = vmatprep.subr.bf16.mxu0 0
        %487 = vmatpush1.bf16.msra.mxu0 0
        %488 = vmatprep.subr.bf16.mxu0 0
        %489 = vmatpush1.bf16.msra.mxu0 0
        %490 = vmatprep.subr.bf16.mxu0 0
        %491 = vmatpush1.bf16.msra.mxu0 0
        %492 = vmatprep.subr.bf16.mxu0 0
        %493 = vmatpush1.bf16.msra.mxu0 0
        %494 = vmatprep.subr.bf16.mxu0 0
        %495 = vmatpush1.bf16.msra.mxu0 0
        %496 = vmatprep.mubr.bf16.mxu0 0
        %497 = vmatmul.mubr.bf16.gmra.mrb[0].mxu0 %v462
        %v498 = vpop.f32.mrb[0].mxu0
        %v499 = vadd.f32 %v458, %v498
        %v500 = vpop.f32.mrb[0].mxu0
        %v501 = vpop.f32.mrb[0].mxu0
        %v502 = vpop.f32.mrb[0].mxu0
        %503 = vdwg.mxu0
        %v504 = vmax.f32 %v499, 0.0
        %506 = vset.pattern.permute.xlu0 0
        %507 = vperm.xlu0 %506, %v278
        %v508 = vpop.permute.xlu0 %507
        %v510 = vmul.f32 %v504, %v508
        %v511 = vrot.slane %v510, 4
        %v512 = vadd.f32 %v510, %v511
        %v513 = vrot.slane %v512, 2
        %v514 = vadd.f32 %v512, %v513
        %v515 = vrot.slane %v514, 1
        %v516 = vadd.f32 %v514, %v515
        %518 = vset.pattern.permute.xlu0 0
        %519 = vperm.xlu0 %518, %v279
        %v520 = vpop.permute.xlu0 %519
        %v522 = vadd.f32 %v516, %v520
        %523 = vst [vmem:[%s251] sm:$0x1] %v522
        %s524 = sand.u32 %s98, 1
        %s525 = scalar_lea.sflag [#allocation4], %s524
        %s526 = sand.u32 %s98, 1
        %s527 = scalar_lea.vmem [#allocation3], %s526
        %s528 = sand.u32 %s124, 1
        %s529 = scalar_lea.sflag [#allocation6], %s528
        %s530 = sand.u32 %s124, 1
        %s531 = smul.addr %s530, 8
        %s532 = scalar_lea.vmem [#allocation5], %s531
        // Predicated region
        $region74: #{tpu_custom_call.1} parent=68 // pred_check
          %p533 = pneg %p108
        $region75: #{tpu_custom_call.1} parent=68 // pred_check_branch
          %535 = sbr.rel (%p533) target = $region77
        $region76: #{tpu_custom_call.1} parent=68 // pred_region
          %s537 = ssub.s32 16, 16
          %538 = vsyncadd %s525, %s537
          %s539 = smul.addr %s22, 16
          %s540 = scalar_lea.hbm %s3, %s539
          %s542 = sshll.u32 %s527, 4
          %s543 = int_to_ptr.vmem [resolvable:$true] %s542
          %545 = dma.vmem_to_hbm [thread:$0]  %s543, 16, %s540, %s525
        $region77: #{tpu_custom_call.1} parent=68 // pred_fallthru
          _
        // Predicated region
        $region78: #{tpu_custom_call.1} parent=68 // pred_check
          %p546 = pneg %p134
        $region79: #{tpu_custom_call.1} parent=68 // pred_check_branch
          %548 = sbr.rel (%p546) target = $region81
        $region80: #{tpu_custom_call.1} parent=68 // pred_region
          %s550 = ssub.s32 128, 128
          %551 = vsyncadd %s529, %s550
          %s552 = smul.addr %s22, 64
          %s553 = scalar_lea.hbm %s4, %s552
          %s554 = sshll.u32 %s532, 4
          %s555 = int_to_ptr.vmem [resolvable:$true] %s554
          %560 = dma.vmem_to_hbm [thread:$0]  %s555, 128, %s553, %s529, 64, 192, 4
        $region81: #{tpu_custom_call.1} parent=68 // pred_fallthru
          _
      $region69: #{tpu_custom_call.1} parent=5 // pred_fallthru
        _
      %p561 = scmp.le.s32.totalorder 2, %s17
      // Predicated region
      $region82: #{tpu_custom_call.1} parent=5 // pred_check
        %p562 = pneg %p561
      $region83: #{tpu_custom_call.1} parent=5 // pred_check_branch
        %564 = sbr.rel (%p562) target = $region85
      $region84: #{tpu_custom_call.1} parent=5 // pred_region
        %s565 = ssub.s32 %s17, 2
        // Predicated region
        $region86: #{tpu_custom_call.1} parent=84 // pred_check
          %p566 = pneg %p114
        $region87: #{tpu_custom_call.1} parent=84 // pred_check_branch
          %568 = sbr.rel (%p566) target = $region89
        $region88: #{tpu_custom_call.1} parent=84 // pred_region
          %s569 = sand.u32 %s99, 1
          %s570 = scalar_lea.sflag [#allocation4], %s569
          %s571 = sand.u32 %s99, 1
          %s572 = scalar_lea.vmem [#allocation3], %s571
          %573 = dma.done %s570, 16
        $region89: #{tpu_custom_call.1} parent=84 // pred_fallthru
          _
        // Predicated region
        $region90: #{tpu_custom_call.1} parent=84 // pred_check
          %p574 = pneg %p140
        $region91: #{tpu_custom_call.1} parent=84 // pred_check_branch
          %576 = sbr.rel (%p574) target = $region93
        $region92: #{tpu_custom_call.1} parent=84 // pred_region
          %s577 = sand.u32 %s125, 1
          %s578 = scalar_lea.sflag [#allocation6], %s577
          %s579 = sand.u32 %s125, 1
          %s580 = smul.addr %s579, 8
          %s581 = scalar_lea.vmem [#allocation5], %s580
          %582 = dma.done %s578, 128
        $region93: #{tpu_custom_call.1} parent=84 // pred_fallthru
          _
      $region85: #{tpu_custom_call.1} parent=5 // pred_fallthru
        _
    $region6: #{tpu_custom_call.1} parent=1 // loop_footer
      %s21 = sadd.s32 1, %s17
    $region7: #{tpu_custom_call.1} parent=1 // loop_footer_branch
      %16 = sbr.rel target = $region3
    $region8: #{tpu_custom_call.1} parent=1 // loop_exit
      _
    %583 = vsyncpa [#allocation4], 1
    %s584 = scalar_lea.sflag [#allocation4], 1
    %585 = vsyncpa %s584, 1
    %586 = vsyncpa [#allocation6], 1
    %s587 = scalar_lea.sflag [#allocation6], 1
    %588 = vsyncpa %s587, 1

</llo_original>
